<compile_context>
chip_gen: v5e
topology: v5e:2x2
jax: 0.10.0
libtpu: 0.0.40
codegen_flags: <defaults>
</compile_context>

<pallas_src>
import functools

import jax
import jax.numpy as jnp
from jax.experimental import pallas as pl
from jax.experimental.pallas import tpu as pltpu

LANE = 128
SUBLANE = 8
MAX_TILE_ROWS = 2048  # (2048, 128) f32 = 1 MiB per input block


def _round_down(x, m):
    return (x // m) * m


def _euclidean_kernel(x_ref, y_ref, o_ref, acc_ref, *,
                      valid_rows, tiles_per_core, needs_mask):
    """Per-core partial sum of squared differences.

    grid = (ncores, tiles_per_core): axis 0 is the (megacore) parallel axis,
    axis 1 is the reduction over this core's row-tiles.
    """
    c = pl.program_id(0)   # core index (parallel axis)
    j = pl.program_id(1)   # reduction step within this core

    @pl.when(j == 0)
    def _init():
        acc_ref[...] = jnp.zeros_like(acc_ref)

    tile_rows = x_ref.shape[0]
    # Cast to f32 on the VPU (HBM traffic stays at the native input width).
    d = x_ref[...].astype(jnp.float32) - y_ref[...].astype(jnp.float32)

    if needs_mask:
        # Logical (unclamped) tile index -> first global row of this tile.
        row0 = (c * tiles_per_core + j) * tile_rows
        row_ids = jax.lax.broadcasted_iota(jnp.int32, (tile_rows, LANE), 0)
        d = jnp.where(row0 + row_ids < valid_rows, d, 0.0)

    # (tile_rows,128) -> (tile_rows//8, 8, 128); reducing the leading axis is
    # pure vreg-wise VPU adds (no per-step cross-lane reduce, no scalar RMW).
    dsq = d * d
    acc_ref[...] += jnp.sum(
        dsq.reshape(tile_rows // SUBLANE, SUBLANE, LANE), axis=0)

    @pl.when(j == pl.num_programs(1) - 1)
    def _finalize():
        # Per-core partial sum of squares; sqrt of the total is done outside.
        o_ref[0, 0] = jnp.sum(acc_ref[...])


def euclidean_loss(x, y, *, max_tile_rows=MAX_TILE_ROWS):
    """JAX/Pallas equivalent of torch.sqrt(torch.sum((x - y) ** 2))."""
    assert x.shape == y.shape, "x and y must have the same shape"

    xf = jnp.ravel(x)
    yf = jnp.ravel(y)
    n = xf.shape[0]

    # Lane-dense (rows, 128) view of the flattened data.  Pad with zeros only
    # when n is not a multiple of 128 (or the input is tiny); zeros add 0.
    data_rows = pl.cdiv(n, LANE)
    rows = max(data_rows, SUBLANE)
    padded_n = rows * LANE
    if padded_n != n:
        xf = jnp.pad(xf, (0, padded_n - n))
        yf = jnp.pad(yf, (0, padded_n - n))
    x2d = xf.reshape(rows, LANE)
    y2d = yf.reshape(rows, LANE)

    # Tile size: as large as allowed, sublane-aligned, never larger than the
    # array (so every window start is in bounds).
    max_tile_rows = max(SUBLANE, _round_down(max_tile_rows, SUBLANE))
    tile_rows = max(SUBLANE, min(max_tile_rows, _round_down(rows, SUBLANE)))
    total_tiles = pl.cdiv(rows, tile_rows)

    # Shard the reduction across the two TensorCores of a v7x chip when there
    # is enough work; on 1-TC chips the parallel axis is a cheap outer loop.
    ncores = 2 if total_tiles > 1 else 1
    tiles_per_core = pl.cdiv(total_tiles, ncores)

    # Mask only if some loaded rows are not backed by real array rows
    # (partial trailing tile, or a core assigned a logically OOB tile).
    needs_mask = (total_tiles * tile_rows != rows) or \
                 (ncores * tiles_per_core != total_tiles)

    last_tile = total_tiles - 1

    def in_index_map(c, j, _tpc=tiles_per_core, _last=last_tile):
        # Clamp so the DMA window never starts past the array; the kernel
        # masks the rows of such (logically out-of-range) tiles to zero.
        return (jnp.minimum(c * _tpc + j, _last), 0)

    kernel = functools.partial(
        _euclidean_kernel,
        valid_rows=rows,
        tiles_per_core=tiles_per_core,
        needs_mask=needs_mask,
    )

    itemsize = jnp.dtype(x2d.dtype).itemsize
    cost = pl.CostEstimate(
        flops=3 * n,                 # sub, mul, add per element
        transcendentals=0,
        bytes_accessed=2 * padded_n * itemsize + 4 * ncores,
    )

    partials = pl.pallas_call(
        kernel,
        out_shape=jax.ShapeDtypeStruct((ncores, 1), jnp.float32),
        grid_spec=pltpu.PrefetchScalarGridSpec(
            num_scalar_prefetch=0,
            grid=(ncores, tiles_per_core),
            in_specs=[
                pl.BlockSpec((tile_rows, LANE), in_index_map),
                pl.BlockSpec((tile_rows, LANE), in_index_map),
            ],
            out_specs=pl.BlockSpec((1, 1), lambda c, j: (c, 0),
                                   memory_space=pltpu.SMEM),
            scratch_shapes=[pltpu.VMEM((SUBLANE, LANE), jnp.float32)],
        ),
        compiler_params=pltpu.CompilerParams(
            dimension_semantics=("parallel", "arbitrary")),
        cost_estimate=cost,
    )(x2d, y2d)

    # Tiny scalar epilogue: combine per-core partial sums, then sqrt.
    return jnp.sqrt(jnp.sum(partials))


if __name__ == "__main__":
    base_key = jax.random.PRNGKey(0)

    def check(shape, tag, **kw):
        kx, ky = jax.random.split(jax.random.fold_in(base_key, tag))
        x = jax.random.normal(kx, shape, dtype=jnp.float32)
        y = jax.random.normal(ky, shape, dtype=jnp.float32)
        out = euclidean_loss(x, y, **kw)
        jax.block_until_ready(out)
        ref = jnp.sqrt(jnp.sum((x - y) ** 2))
        assert jnp.allclose(out, ref, rtol=1e-5, atol=1e-5), (shape, out, ref)
        return out

    # Small NCHW-like shape consistent with the module's generic forward.
    check((2, 4, 16, 16), 0)
    # Ragged size: exercises the pad fallback + in-kernel tail masking
    # + megacore split with a clamped out-of-range tile.
    check((3, 5, 7, 11), 1)
    # Multi-tile reduction per core (small max_tile_rows just for the test).
    check((2, 8, 32, 32), 2, max_tile_rows=32)

    print("KERNEL_OK")
</pallas_src>

<mosaic_0001>
module attributes {stable_mosaic.version = 11 : i64} {
  func.func @_euclidean_kernel(%arg0: i32, %arg1: i32, %arg2: memref<16x128xf32, #tpu.memory_space<vmem>>, %arg3: memref<16x128xf32, #tpu.memory_space<vmem>>, %arg4: memref<1x1xf32, #tpu.memory_space<smem>>, %arg5: memref<8x128xf32, #tpu.memory_space<vmem>>) attributes {dimension_semantics = [#tpu.dimension_semantics<parallel>, #tpu.dimension_semantics<arbitrary>], iteration_bounds = array<i64: 1, 1>, scalar_prefetch = 0 : i64, scratch_operands = 1 : i64, tpu.core_type = #tpu.core_type<tc>, window_params = [{transform_indices = @transform_0, window_bounds = array<i64: 16, 128>}, {transform_indices = @transform_1, window_bounds = array<i64: 16, 128>}, {transform_indices = @transform_2, window_bounds = array<i64: 1, 1>}]} {
    %c0_i32 = arith.constant 0 : i32
    %0 = arith.cmpi eq, %arg1, %c0_i32 : i32
    %1 = arith.extui %0 : i1 to i32
    %c0_i32_0 = arith.constant 0 : i32
    %2 = arith.cmpi ne, %1, %c0_i32_0 : i32
    scf.if %2 {
      %cst_10 = arith.constant 0.000000e+00 : f32
      %15 = vector.broadcast %cst_10 : f32 to vector<8x128xf32>
      %c0_11 = arith.constant 0 : index
      %c0_12 = arith.constant 0 : index
      %16 = vector.load %arg5[%c0_11, %c0_12] : memref<8x128xf32, #tpu.memory_space<vmem>>, vector<8x128xf32>
      tpu.vector_store %arg5[%c0_11, %c0_12], %15 {strides = array<i32>} : memref<8x128xf32, #tpu.memory_space<vmem>>, vector<8x128xf32>,
    } else {
    }
    %c0 = arith.constant 0 : index
    %c0_1 = arith.constant 0 : index
    %3 = vector.load %arg2[%c0, %c0_1] : memref<16x128xf32, #tpu.memory_space<vmem>>, vector<16x128xf32>
    %c0_2 = arith.constant 0 : index
    %c0_3 = arith.constant 0 : index
    %4 = vector.load %arg3[%c0_2, %c0_3] : memref<16x128xf32, #tpu.memory_space<vmem>>, vector<16x128xf32>
    %5 = arith.subf %3, %4 : vector<16x128xf32>
    %6 = arith.mulf %5, %5 : vector<16x128xf32>
    %c0_4 = arith.constant 0 : index
    %c0_5 = arith.constant 0 : index
    %7 = vector.load %arg5[%c0_4, %c0_5] : memref<8x128xf32, #tpu.memory_space<vmem>>, vector<8x128xf32>
    %8 = vector.shape_cast %6 : vector<16x128xf32> to vector<2x8x128xf32>
    %cst = arith.constant dense<0.000000e+00> : vector<8x128xf32>
    %9 = vector.multi_reduction <add>, %8, %cst [0] : vector<2x8x128xf32> to vector<8x128xf32>
    %10 = arith.addf %7, %9 : vector<8x128xf32>
    %c0_6 = arith.constant 0 : index
    %c0_7 = arith.constant 0 : index
    %11 = vector.load %arg5[%c0_6, %c0_7] : memref<8x128xf32, #tpu.memory_space<vmem>>, vector<8x128xf32>
    tpu.vector_store %arg5[%c0_6, %c0_7], %10 {strides = array<i32>} : memref<8x128xf32, #tpu.memory_space<vmem>>, vector<8x128xf32>,
    %c0_i32_8 = arith.constant 0 : i32
    %12 = arith.cmpi eq, %arg1, %c0_i32_8 : i32
    %13 = arith.extui %12 : i1 to i32
    %c0_i32_9 = arith.constant 0 : i32
    %14 = arith.cmpi ne, %13, %c0_i32_9 : i32
    scf.if %14 {
      %c0_10 = arith.constant 0 : index
      %c0_11 = arith.constant 0 : index
      %15 = vector.load %arg5[%c0_10, %c0_11] : memref<8x128xf32, #tpu.memory_space<vmem>>, vector<8x128xf32>
      %16 = vector.shape_cast %15 : vector<8x128xf32> to vector<1x8x128xf32>
      %cst_12 = arith.constant dense<0.000000e+00> : vector<1xf32>
      %17 = vector.multi_reduction <add>, %16, %cst_12 [1, 2] : vector<1x8x128xf32> to vector<1xf32>
      %18 = vector.shape_cast %17 : vector<1xf32> to vector<1x1x1xf32>
      %19 = vector.extract %18[0, 0, 0] : f32 from vector<1x1x1xf32>
      %c0_13 = arith.constant 0 : index
      %c0_14 = arith.constant 0 : index
      %20 = memref.load %arg4[%c0_13, %c0_14] : memref<1x1xf32, #tpu.memory_space<smem>>
      memref.store %19, %arg4[%c0_13, %c0_14] : memref<1x1xf32, #tpu.memory_space<smem>>
    } else {
    }
    return
  }
  func.func @transform_0(%arg0: i32, %arg1: i32) -> (i32, i32) {
    %c1_i32 = arith.constant 1 : i32
    %0 = arith.muli %arg0, %c1_i32 : i32
    %1 = arith.addi %0, %arg1 : i32
    %c0_i32 = arith.constant 0 : i32
    %2 = arith.minsi %1, %c0_i32 : i32
    %c0_i32_0 = arith.constant 0 : i32
    %c0_i32_1 = arith.constant 0 : i32
    return %2, %c0_i32_0 : i32, i32
  }
  func.func @transform_1(%arg0: i32, %arg1: i32) -> (i32, i32) {
    %c1_i32 = arith.constant 1 : i32
    %0 = arith.muli %arg0, %c1_i32 : i32
    %1 = arith.addi %0, %arg1 : i32
    %c0_i32 = arith.constant 0 : i32
    %2 = arith.minsi %1, %c0_i32 : i32
    %c0_i32_0 = arith.constant 0 : i32
    %c0_i32_1 = arith.constant 0 : i32
    return %2, %c0_i32_0 : i32, i32
  }
  func.func @transform_2(%arg0: i32, %arg1: i32) -> (i32, i32) {
    %c0_i32 = arith.constant 0 : i32
    %c0_i32_0 = arith.constant 0 : i32
    return %arg0, %c0_i32 : i32, i32
  }
}

</mosaic_0001>

<llo_original>
// kernel: tpu_custom_call.1
$region0: #{tpu_custom_call.1}
  #allocation0 [shape = 'u32[]', space=smem, size = 0x4, offset = 0x4, fixed_abs, tag = 'smem constant byte address 0x4 - core index']
  #allocation1 [shape = 'u32[72,128]{1,0:T(1,128)}', space=vmem, size = 0x9000, scoped, tag = 'internal scratch']
  #allocation2 [shape = 'f32[8,128]{1,0:T(8,128)}', space=vmem, size = 0x1000, scoped, tag = 'scratch operand']
  %s0 = inlined_call_operand.hbm [shape: f32[16,128], index: 0, kind: input, shape index: {}]
  %s1 = inlined_call_operand.hbm [shape: f32[16,128], index: 1, kind: input, shape index: {}]
  %s2 = inlined_call_operand.hbm [shape: f32[1,1], index: 2, kind: output, shape index: {}]
  %s3 = sld [smem:[#allocation0]]
  $region34: #{tpu_custom_call.1} parent=0
    _
  %s5 = ssub.s32 1, %s3
  %s6 = scalar_select 0, %s5, %s3
  $region1: #{tpu_custom_call.1} parent=0
    #allocation3 [shape = 'u8[8192]{0}', space=vmem, size = 0x2000, scoped, tag = 'input window, operand 0, single buffered']
    #allocation4 [shape = 's32[1]{0}', space=sflag, size = 0x4, scoped, tag = 'scoped memory for tpu_custom_call.1']
    #allocation5 [shape = 's32[1]{0}', space=sflag, size = 0x4, scoped, tag = 'scoped memory for tpu_custom_call.1']
    #allocation6 [shape = 'u8[8192]{0}', space=vmem, size = 0x2000, scoped, tag = 'input window, operand 1, single buffered']
    #allocation7 [shape = 's32[1]{0}', space=sflag, size = 0x4, scoped, tag = 'scoped memory for tpu_custom_call.1']
    #allocation8 [shape = 'u8[512]{0}', space=smem, size = 0x200, scoped, tag = 'output window, operand 0, single buffered']
    %7 = vsyncpa [#allocation4], 0
    %8 = vsyncpa [#allocation7], 0
    %9 = vsyncpa [#allocation5], 0
    // Predicated region
    $region2: #{tpu_custom_call.1} parent=1 // pred_check
      _
    $region3: #{tpu_custom_call.1} parent=1 // pred_check_branch
      %11 = sbr.rel (0) target = $region5
    $region4: #{tpu_custom_call.1} parent=1 // pred_region
      %s12 = sadd.s32 0, 0
      %p13 = scmp.lt.s32.totalorder %s12, 0
      %s14 = scalar_select %p13, %s12, 0
      %s15 = smul.u32 2, %s14
      %17 = vsyncadd [#allocation4], 0
      %s18 = smul.addr %s15, 8
      %s19 = scalar_lea.hbm %s0, %s18
      %s20 = sshll.u32 %s19, 4
      %s21 = int_to_ptr.hbm [resolvable:$true] %s20
      %s22 = sshll.u32 [#allocation3], 4
      %s23 = int_to_ptr.vmem [resolvable:$true] %s22
      %28 = dma.hbm_to_vmem [thread:$0]  %s21, 256, %s23, [#allocation4], 128, 128, 8
    $region5: #{tpu_custom_call.1} parent=1 // pred_fallthru
      _
    // Predicated region
    $region6: #{tpu_custom_call.1} parent=1 // pred_check
      _
    $region7: #{tpu_custom_call.1} parent=1 // pred_check_branch
      %30 = sbr.rel (0) target = $region9
    $region8: #{tpu_custom_call.1} parent=1 // pred_region
      %s31 = sadd.s32 0, 0
      %p32 = scmp.lt.s32.totalorder %s31, 0
      %s33 = scalar_select %p32, %s31, 0
      %s34 = smul.u32 2, %s33
      %36 = vsyncadd [#allocation7], 0
      %s37 = smul.addr %s34, 8
      %s38 = scalar_lea.hbm %s1, %s37
      %s39 = sshll.u32 %s38, 4
      %s40 = int_to_ptr.hbm [resolvable:$true] %s39
      %s41 = sshll.u32 [#allocation6], 4
      %s42 = int_to_ptr.vmem [resolvable:$true] %s41
      %47 = dma.hbm_to_vmem [thread:$0]  %s40, 256, %s42, [#allocation7], 128, 128, 8
    $region9: #{tpu_custom_call.1} parent=1 // pred_fallthru
      _
    // Predicated region
    $region10: #{tpu_custom_call.1} parent=1 // pred_check
      _
    $region11: #{tpu_custom_call.1} parent=1 // pred_check_branch
      %49 = sbr.rel (0) target = $region13
    $region12: #{tpu_custom_call.1} parent=1 // pred_region
      %51 = dma.done [#allocation4], 256
    $region13: #{tpu_custom_call.1} parent=1 // pred_fallthru
      _
    // Predicated region
    $region14: #{tpu_custom_call.1} parent=1 // pred_check
      _
    $region15: #{tpu_custom_call.1} parent=1 // pred_check_branch
      %53 = sbr.rel (0) target = $region17
    $region16: #{tpu_custom_call.1} parent=1 // pred_region
      %55 = dma.done [#allocation7], 256
    $region17: #{tpu_custom_call.1} parent=1 // pred_fallthru
      _
    %s56 = sadd.s32 0, 0
    %p57 = scmp.lt.s32.totalorder %s56, 0
    %s58 = scalar_select %p57, %s56, 0
    %s59 = smul.u32 2, %s58
    %s60 = sadd.s32 0, 0
    %p61 = scmp.lt.s32.totalorder %s60, 0
    %s62 = scalar_select %p61, %s60, 0
    %s63 = smul.u32 2, %s62
    %p64 = scmp.eq.s32.totalorder 0, 0
    // Predicated region
    $region18: #{tpu_custom_call.1} parent=1 // pred_check
      %p65 = pneg %p64
    $region19: #{tpu_custom_call.1} parent=1 // pred_check_branch
      %67 = sbr.rel (%p65) target = $region21
    $region20: #{tpu_custom_call.1} parent=1 // pred_region
      %68 = vst [vmem:[#allocation2] sm:$0xff] 0.0
    $region21: #{tpu_custom_call.1} parent=1 // pred_fallthru
      _
    %v69 = vld [vmem:[#allocation3] sm:$0xff]
    %v70 = vld [vmem:[#allocation3 + $0x8] sm:$0xff]
    %v71 = vld [vmem:[#allocation6] sm:$0xff]
    %v72 = vld [vmem:[#allocation6 + $0x8] sm:$0xff]
    %v73 = vsub.f32 %v69, %v71
    %v74 = vsub.f32 %v70, %v72
    %v75 = vmul.f32 %v73, %v73
    %v76 = vmul.f32 %v74, %v74
    %v77 = vld [vmem:[#allocation2] sm:$0xff]
    %v78 = vadd.f32 %v75, %v76
    %v79 = vadd.f32 %v77, %v78
    %80 = vst [vmem:[#allocation2] sm:$0xff] %v79
    // Predicated region
    $region22: #{tpu_custom_call.1} parent=1 // pred_check
      %p81 = pneg %p64
    $region23: #{tpu_custom_call.1} parent=1 // pred_check_branch
      %83 = sbr.rel (%p81) target = $region25
    $region24: #{tpu_custom_call.1} parent=1 // pred_region
      %v84 = vld [vmem:[#allocation2] sm:$0xff]
      %85 = vadd.xlane.f32.xlu0 %v84
      %v86 = vpop.xlane.xlu0 %85
      %v87 = vrot.slane %v86, 4
      %v88 = vadd.f32 %v86, %v87
      %v89 = vrot.slane %v88, 2
      %v90 = vadd.f32 %v88, %v89
      %v91 = vrot.slane %v90, 1
      %v92 = vadd.f32 %v90, %v91
      %s93 = vtos %v92
      %s94 = scalar_lea.smem [#allocation8], 0
      %95 = sst [smem:[%s94]] %s93
    $region25: #{tpu_custom_call.1} parent=1 // pred_fallthru
      _
    // Predicated region
    $region26: #{tpu_custom_call.1} parent=1 // pred_check
      _
    $region27: #{tpu_custom_call.1} parent=1 // pred_check_branch
      %97 = sbr.rel (0) target = $region29
    $region28: #{tpu_custom_call.1} parent=1 // pred_region
      %99 = vsyncadd [#allocation5], 0
      %s101 = sshll.u32 %s2, 4
      %s102 = int_to_ptr.hbm [resolvable:$true] %s101
      %104 = dma.smem_to_hbm [#allocation8], 16, %s102, [#allocation5]
    $region29: #{tpu_custom_call.1} parent=1 // pred_fallthru
      _
    // Predicated region
    $region30: #{tpu_custom_call.1} parent=1 // pred_check
      _
    $region31: #{tpu_custom_call.1} parent=1 // pred_check_branch
      %106 = sbr.rel (0) target = $region33
    $region32: #{tpu_custom_call.1} parent=1 // pred_region
      %108 = dma.done [#allocation5], 16
    $region33: #{tpu_custom_call.1} parent=1 // pred_fallthru
      _
    %109 = sfence
    %110 = vsyncpa [#allocation4], 1
    %111 = vsyncpa [#allocation7], 1
    %112 = vsyncpa [#allocation5], 1

</llo_original>
